<compile_context>
chip_gen: v7x
topology: tpu7x:2x2x1
jax: 0.10.0
libtpu: 0.0.40
codegen_flags: <defaults>
</compile_context>

<pallas_src>
import functools

import jax
import jax.numpy as jnp
import numpy as np
from jax import lax
from jax.experimental import pallas as pl
from jax.experimental.pallas import tpu as pltpu


def _conv_bn_act_kernel(x_ref, b_ref, shift_ref, o_ref, *, K, act, neg_slope):
    """One (batch, row-band) tile per grid step.

    x_ref:     (1, 1, TH+K-1, Wp*Cin)  lane-dense band+halo of padded input (bf16)
    b_ref:     (K, Wp*Cin, W*Cout)     block-Toeplitz scale-folded weights (bf16, resident)
    shift_ref: (1, W*Cout)             folded bias/BN shift tiled over W (f32, resident)
    o_ref:     (1, TH, W*Cout)         lane-dense output band (bf16)
    """
    TH = o_ref.shape[1]

    def tap(kh):
        # Rows [kh, kh+TH) of the band against the kh-th banded weight matrix.
        return lax.dot_general(
            x_ref[0, 0, kh:kh + TH, :], b_ref[kh],
            dimension_numbers=(((1,), (0,)), ((), ())),
            preferred_element_type=jnp.float32)

    acc = tap(0)
    for kh in range(1, K):                       # K is small & static -> unrolled
        acc = acc + tap(kh)

    y = acc + shift_ref[...]                     # conv bias + folded BN (f32)
    if act:
        y = jnp.where(y > 0, y, neg_slope * y)   # LeakyReLU(0.2)
    o_ref[0] = y.astype(o_ref.dtype)


def _fold_params(weight_oihw, bias, *, bn, bn_gamma, bn_beta, bn_mean, bn_var, bn_eps):
    """Fold conv bias + inference BatchNorm into (bf16 scaled weights, f32 shift)."""
    Cout = weight_oihw.shape[0]
    if bn:
        scale = bn_gamma / jnp.sqrt(bn_var + bn_eps)
        shift = (bias - bn_mean) * scale + bn_beta
    else:
        scale = jnp.ones((Cout,), jnp.float32)
        shift = bias.astype(jnp.float32)
    # (Cout, Cin, K, K) -> (K, K, Cin, Cout) with the BN scale folded in.
    w_kkio = jnp.transpose(weight_oihw, (2, 3, 1, 0)).astype(jnp.float32)
    w_kkio = (w_kkio * scale[None, None, None, :]).astype(jnp.bfloat16)
    return w_kkio, shift.astype(jnp.float32)


def _build_banded_weights(w_kkio_f32, *, W, K, Cin, Cout):
    """Embed the (K,K,Cin,Cout) taps into K block-Toeplitz (along W) matrices.

    B[kh, (w+kw)*Cin + ci, w*Cout + co] = w_kkio[kh, kw, ci, co], so that for a
    lane-fused padded input row x[(wp)*Cin + ci], x @ B[kh] is the lane-fused
    output row over (w, co).  This keeps both matmul operands lane-dense for
    small Cin/Cout and removes any in-kernel im2col / concat.
    """
    Wp = W + K - 1
    wr = jnp.arange(Wp)[:, None]                       # padded-input column
    wc = jnp.arange(W)[None, :]                        # output column
    d = wr - wc                                        # = kw where valid
    valid = (d >= 0) & (d < K)
    taps = w_kkio_f32[:, jnp.clip(d, 0, K - 1), :, :]  # (K, Wp, W, Cin, Cout)
    taps = jnp.where(valid[None, :, :, None, None], taps, 0.0)
    return jnp.transpose(taps, (0, 1, 3, 2, 4)).reshape(K, Wp * Cin, W * Cout)


def _vmem_limit_bytes():
    """Per-generation VMEM limit: ~80% of physical (v5e/v6e 128 MiB, v7x 64 MiB/TC)."""
    try:
        cap = int(pltpu.get_tpu_info().vmem_capacity_bytes)
        return max(32 * 2**20, min(int(cap * 0.8), 112 * 2**20))
    except Exception:
        return 48 * 2**20          # safe on all generations


@functools.partial(jax.jit, static_argnames=("bn", "act", "bn_eps", "band_rows"))
def basic_conv(x_nchw, weight_oihw, bias, *, bn=False, act=False,
               bn_gamma=None, bn_beta=None, bn_mean=None, bn_var=None,
               bn_eps=1e-5, band_rows=32):
    """Forward pass of BasicConv. x_nchw: (N, Cin, H, W); weight: (Cout, Cin, K, K).

    Returns bf16 NCHW (the kernel writes bf16 to halve HBM writeback; cast to
    f32 outside if exact module dtype is needed).
    """
    N, Cin, H, W = x_nchw.shape
    Cout, Cin_w, K, K2 = weight_oihw.shape
    assert Cin_w == Cin and K2 == K
    assert K % 2 == 1, ("BasicConv Pallas kernel supports odd kernel sizes only: "
                        "stride=1, padding=K//2 preserves H,W only for odd K.")
    pad = K // 2
    Wp = W + 2 * pad
    WpCin, WCout = Wp * Cin, W * Cout

    # ---- row-band tiling: cdiv grid + partial (masked) last band ----
    TH = H if band_rows >= H else max(8, (band_rows // 8) * 8)   # mult of 8 or full H
    n_bands = (H + TH - 1) // TH
    THK = TH + K - 1

    # ---- fold bias/BN into the weights, build lane-dense banded weights ----
    w_kkio, shift = _fold_params(weight_oihw, bias, bn=bn, bn_gamma=bn_gamma,
                                 bn_beta=bn_beta, bn_mean=bn_mean, bn_var=bn_var,
                                 bn_eps=bn_eps)
    B = _build_banded_weights(w_kkio.astype(jnp.float32),
                              W=W, K=K, Cin=Cin, Cout=Cout).astype(jnp.bfloat16)
    shift_t = jnp.tile(shift, W).reshape(1, WCout)               # (1, W*Cout) f32

    # ---- lane-dense, halo-banded input view ----
    # NCHW -> NHWC (bf16), zero-pad (extra bottom rows so every band is full),
    # fuse (W, Cin) into the lane axis, slice overlapping row bands.  Under jit
    # these fuse into ~one XLA pass over x.
    x_nhwc = jnp.transpose(x_nchw, (0, 2, 3, 1)).astype(jnp.bfloat16)
    pad_bot = n_bands * TH - H + pad
    x_pad = jnp.pad(x_nhwc, ((0, 0), (pad, pad_bot), (pad, pad), (0, 0)))
    Hp = n_bands * TH + K - 1
    x_fused = x_pad.reshape(N, Hp, WpCin)
    row_idx = jnp.arange(n_bands)[:, None] * TH + jnp.arange(THK)[None, :]
    x_bands = jnp.take(x_fused, row_idx, axis=1)                 # (N, nb, THK, Wp*Cin)

    # ---- VMEM budget: per-generation limit + fit check for the chosen TH ----
    vmem_limit = _vmem_limit_bytes()
    need = (2 * THK * WpCin * 2            # double-buffered bf16 input band
            + 2 * K * WpCin * WCout * 2    # resident banded weights (conservative x2)
            + 2 * WCout * 4                # shift
            + 2 * TH * WCout * 2           # double-buffered bf16 output band
            + 4 * TH * WCout * 4)          # f32 accumulator / epilogue temps
    assert need < vmem_limit, (
        f"Tiling needs ~{need} B VMEM > limit {vmem_limit} B; reduce band_rows "
        "(and for large W/Cin/Cout use a W-tiled / channels-in-lanes path).")

    flops = 2 * N * n_bands * K * TH * WpCin * WCout
    bytes_accessed = (x_bands.size * 2 + B.size * 2 + shift_t.size * 4
                      + N * H * WCout * 2)
    kernel = functools.partial(_conv_bn_act_kernel, K=K, act=act, neg_slope=0.2)

    out = pl.pallas_call(
        kernel,
        out_shape=jax.ShapeDtypeStruct((N, H, WCout), jnp.bfloat16),
        grid_spec=pltpu.PrefetchScalarGridSpec(
            num_scalar_prefetch=0,
            grid=(N, n_bands),
            in_specs=[
                # band + halo rows for this (batch, band): auto-pipelined, only
                # 2 x (TH+K-1) rows resident (never the whole padded image).
                pl.BlockSpec((1, 1, THK, WpCin), lambda n, j: (n, j, 0, 0)),
                # banded weights / shift: constant index map -> resident in VMEM.
                pl.BlockSpec((K, WpCin, WCout), lambda n, j: (0, 0, 0)),
                pl.BlockSpec((1, WCout), lambda n, j: (0, 0)),
            ],
            out_specs=pl.BlockSpec((1, TH, WCout), lambda n, j: (n, j, 0)),
        ),
        compiler_params=pltpu.CompilerParams(
            dimension_semantics=("parallel", "parallel"),
            vmem_limit_bytes=vmem_limit,
        ),
        cost_estimate=pl.CostEstimate(flops=flops, transcendentals=0,
                                      bytes_accessed=bytes_accessed),
    )(x_bands, B, shift_t)

    # (N, H, W*Cout) -> (N, Cout, H, W) to match the PyTorch convention.
    # TODO(synk): keep the lane-dense NHWC form end-to-end between layers.
    out_nhwc = out.reshape(N, H, W, Cout)
    return jnp.transpose(out_nhwc, (0, 3, 1, 2))


def _reference_matched(x_nchw, weight_oihw, bias, *, bn, act,
                       bn_gamma=None, bn_beta=None, bn_mean=None, bn_var=None,
                       bn_eps=1e-5):
    """Pure-JAX reference replicating the kernel's bf16 data path (bf16 inputs,
    bf16 scale-folded weights, f32 accumulation); output left in f32."""
    K = weight_oihw.shape[2]
    w_kkio, shift = _fold_params(weight_oihw, bias, bn=bn, bn_gamma=bn_gamma,
                                 bn_beta=bn_beta, bn_mean=bn_mean, bn_var=bn_var,
                                 bn_eps=bn_eps)
    wq_oihw = jnp.transpose(w_kkio.astype(jnp.float32), (3, 2, 0, 1))
    xq = x_nchw.astype(jnp.bfloat16).astype(jnp.float32)
    y = lax.conv_general_dilated(
        xq, wq_oihw, window_strides=(1, 1), padding=[(K // 2, K // 2)] * 2,
        dimension_numbers=("NCHW", "OIHW", "NCHW"), precision=lax.Precision.HIGHEST)
    y = y + shift.reshape(1, -1, 1, 1)
    if act:
        y = jnp.where(y > 0, y, 0.2 * y)
    return y


def _reference_module(x_nchw, weight_oihw, bias, *, bn, act,
                      bn_gamma=None, bn_beta=None, bn_mean=None, bn_var=None,
                      bn_eps=1e-5):
    """Full-precision reference matching the PyTorch module (inference BN)."""
    K = weight_oihw.shape[2]
    y = lax.conv_general_dilated(
        x_nchw.astype(jnp.float32), weight_oihw.astype(jnp.float32),
        window_strides=(1, 1), padding=[(K // 2, K // 2)] * 2,
        dimension_numbers=("NCHW", "OIHW", "NCHW"), precision=lax.Precision.HIGHEST)
    y = y + bias.reshape(1, -1, 1, 1)
    if bn:
        inv = bn_gamma / jnp.sqrt(bn_var + bn_eps)
        y = (y - bn_mean.reshape(1, -1, 1, 1)) * inv.reshape(1, -1, 1, 1) \
            + bn_beta.reshape(1, -1, 1, 1)
    if act:
        y = jnp.where(y > 0, y, 0.2 * y)
    return y


def _run_case(*, N, Cin, H, W, Cout, K, bn, act, band_rows, key):
    ks = jax.random.split(key, 7)
    x = jax.random.normal(ks[0], (N, Cin, H, W), jnp.float32)
    weight = jax.random.normal(ks[1], (Cout, Cin, K, K), jnp.float32) * 0.1
    bias = jax.random.normal(ks[2], (Cout,), jnp.float32) * 0.1
    bn_kwargs = {}
    if bn:
        bn_kwargs = dict(
            bn_gamma=1.0 + 0.1 * jax.random.normal(ks[3], (Cout,), jnp.float32),
            bn_beta=0.1 * jax.random.normal(ks[4], (Cout,), jnp.float32),
            bn_mean=0.1 * jax.random.normal(ks[5], (Cout,), jnp.float32),
            bn_var=jnp.abs(1.0 + 0.1 * jax.random.normal(ks[6], (Cout,), jnp.float32)),
        )

    out = basic_conv(x, weight, bias, bn=bn, act=act, band_rows=band_rows, **bn_kwargs)
    out = jax.block_until_ready(out).astype(jnp.float32)

    # Tight check vs a reference with the identical bf16 data path (kernel
    # output additionally bf16-rounded -> 1e-2 tolerances).
    ref_q = _reference_matched(x, weight, bias, bn=bn, act=act, **bn_kwargs)
    np.testing.assert_allclose(np.asarray(out), np.asarray(ref_q), rtol=1e-2, atol=1e-2)

    # Loose check vs the full-precision module semantics (bf16 cast error).
    ref_f = _reference_module(x, weight, bias, bn=bn, act=act, **bn_kwargs)
    np.testing.assert_allclose(np.asarray(out), np.asarray(ref_f), rtol=1e-1, atol=1e-1)


if __name__ == "__main__":
    key = jax.random.PRNGKey(0)
    k1, k2 = jax.random.split(key)

    # BasicConv(4, 8, 3, bn=True, act=True): band_rows=8 at H=16 exercises the
    # multi-band (halo) path; production sizes would use band_rows=32..64.
    _run_case(N=2, Cin=4, H=16, W=16, Cout=8, K=3, bn=True, act=True,
              band_rows=8, key=k1)

    # Odd sizes: H=13 with TH=8 exercises the partial (clipped) last band;
    # no BN, LeakyReLU only.
    _run_case(N=1, Cin=3, H=13, W=10, Cout=5, K=3, bn=False, act=True,
              band_rows=8, key=k2)

    print("KERNEL_OK")
</pallas_src>

<mosaic_0001>
module attributes {stable_mosaic.version = 11 : i64} {
  func.func @_conv_bn_act_kernel(%arg0: i32, %arg1: i32, %arg2: memref<1x1x10x72xbf16, #tpu.memory_space<vmem>>, %arg3: memref<3x72x128xbf16, #tpu.memory_space<vmem>>, %arg4: memref<1x128xf32, #tpu.memory_space<vmem>>, %arg5: memref<1x8x128xbf16, #tpu.memory_space<vmem>>) attributes {dimension_semantics = [#tpu.dimension_semantics<parallel>, #tpu.dimension_semantics<parallel>], iteration_bounds = array<i64: 2, 2>, scalar_prefetch = 0 : i64, scratch_operands = 0 : i64, tpu.core_type = #tpu.core_type<tc>, window_params = [{transform_indices = @transform_0, window_bounds = array<i64: 1, 1, 10, 72>}, {pipeline_mode = #tpu.pipeline_mode<synchronous>, transform_indices = @transform_1, window_bounds = array<i64: 3, 72, 128>}, {pipeline_mode = #tpu.pipeline_mode<synchronous>, transform_indices = @transform_2, window_bounds = array<i64: 1, 128>}, {transform_indices = @transform_3, window_bounds = array<i64: 1, 8, 128>}]} {
    %c0 = arith.constant 0 : index
    %c0_0 = arith.constant 0 : index
    %c0_1 = arith.constant 0 : index
    %c0_2 = arith.constant 0 : index
    %0 = vector.load %arg2[%c0, %c0_0, %c0_1, %c0_2] : memref<1x1x10x72xbf16, #tpu.memory_space<vmem>>, vector<1x1x8x72xbf16>
    %1 = vector.shape_cast %0 : vector<1x1x8x72xbf16> to vector<8x72xbf16>
    %c0_3 = arith.constant 0 : index
    %c0_4 = arith.constant 0 : index
    %c0_5 = arith.constant 0 : index
    %2 = vector.load %arg3[%c0_3, %c0_4, %c0_5] : memref<3x72x128xbf16, #tpu.memory_space<vmem>>, vector<1x72x128xbf16>
    %3 = vector.shape_cast %2 : vector<1x72x128xbf16> to vector<72x128xbf16>
    %cst = arith.constant dense<0.000000e+00> : vector<8x128xf32>
    %4 = tpu.matmul %1, %3, %cst {dimension_numbers = #tpu.dot_dimension_numbers<[1], [0], [0], [1], [0, 0, 1, 1], [], []>} : vector<8x72xbf16>, vector<72x128xbf16>, vector<8x128xf32> -> vector<8x128xf32>
    %c0_6 = arith.constant 0 : index
    %c0_7 = arith.constant 0 : index
    %c1 = arith.constant 1 : index
    %c0_8 = arith.constant 0 : index
    %5 = vector.load %arg2[%c0_6, %c0_7, %c1, %c0_8] : memref<1x1x10x72xbf16, #tpu.memory_space<vmem>>, vector<1x1x8x72xbf16>
    %6 = vector.shape_cast %5 : vector<1x1x8x72xbf16> to vector<8x72xbf16>
    %c1_9 = arith.constant 1 : index
    %c0_10 = arith.constant 0 : index
    %c0_11 = arith.constant 0 : index
    %7 = vector.load %arg3[%c1_9, %c0_10, %c0_11] : memref<3x72x128xbf16, #tpu.memory_space<vmem>>, vector<1x72x128xbf16>
    %8 = vector.shape_cast %7 : vector<1x72x128xbf16> to vector<72x128xbf16>
    %cst_12 = arith.constant dense<0.000000e+00> : vector<8x128xf32>
    %9 = tpu.matmul %6, %8, %cst_12 {dimension_numbers = #tpu.dot_dimension_numbers<[1], [0], [0], [1], [0, 0, 1, 1], [], []>} : vector<8x72xbf16>, vector<72x128xbf16>, vector<8x128xf32> -> vector<8x128xf32>
    %10 = arith.addf %4, %9 : vector<8x128xf32>
    %c0_13 = arith.constant 0 : index
    %c0_14 = arith.constant 0 : index
    %c2 = arith.constant 2 : index
    %c0_15 = arith.constant 0 : index
    %11 = vector.load %arg2[%c0_13, %c0_14, %c2, %c0_15] : memref<1x1x10x72xbf16, #tpu.memory_space<vmem>>, vector<1x1x8x72xbf16>
    %12 = vector.shape_cast %11 : vector<1x1x8x72xbf16> to vector<8x72xbf16>
    %c2_16 = arith.constant 2 : index
    %c0_17 = arith.constant 0 : index
    %c0_18 = arith.constant 0 : index
    %13 = vector.load %arg3[%c2_16, %c0_17, %c0_18] : memref<3x72x128xbf16, #tpu.memory_space<vmem>>, vector<1x72x128xbf16>
    %14 = vector.shape_cast %13 : vector<1x72x128xbf16> to vector<72x128xbf16>
    %cst_19 = arith.constant dense<0.000000e+00> : vector<8x128xf32>
    %15 = tpu.matmul %12, %14, %cst_19 {dimension_numbers = #tpu.dot_dimension_numbers<[1], [0], [0], [1], [0, 0, 1, 1], [], []>} : vector<8x72xbf16>, vector<72x128xbf16>, vector<8x128xf32> -> vector<8x128xf32>
    %16 = arith.addf %10, %15 : vector<8x128xf32>
    %c0_20 = arith.constant 0 : index
    %c0_21 = arith.constant 0 : index
    %17 = vector.load %arg4[%c0_20, %c0_21] : memref<1x128xf32, #tpu.memory_space<vmem>>, vector<1x128xf32>
    %18 = vector.broadcast %17 : vector<1x128xf32> to vector<8x128xf32>
    %19 = arith.addf %16, %18 : vector<8x128xf32>
    %cst_22 = arith.constant 0.000000e+00 : f32
    %20 = vector.broadcast %cst_22 : f32 to vector<8x128xf32>
    %21 = arith.cmpf ogt, %19, %20 : vector<8x128xf32>
    %cst_23 = arith.constant 2.000000e-01 : f32
    %22 = vector.broadcast %cst_23 : f32 to vector<8x128xf32>
    %23 = arith.mulf %22, %19 : vector<8x128xf32>
    %24 = arith.select %21, %19, %23 : vector<8x128xi1>, vector<8x128xf32>
    %25 = arith.truncf %24 : vector<8x128xf32> to vector<8x128xbf16>
    %c0_24 = arith.constant 0 : index
    %c0_25 = arith.constant 0 : index
    %c0_26 = arith.constant 0 : index
    %26 = vector.load %arg5[%c0_24, %c0_25, %c0_26] : memref<1x8x128xbf16, #tpu.memory_space<vmem>>, vector<1x8x128xbf16>
    %27 = vector.shape_cast %26 : vector<1x8x128xbf16> to vector<8x128xbf16>
    %28 = vector.shape_cast %25 : vector<8x128xbf16> to vector<1x8x128xbf16>
    tpu.vector_store %arg5[%c0_24, %c0_25, %c0_26], %28 {strides = array<i32>} : memref<1x8x128xbf16, #tpu.memory_space<vmem>>, vector<1x8x128xbf16>,
    return
  }
  func.func @transform_0(%arg0: i32, %arg1: i32) -> (i32, i32, i32, i32) {
    %c0_i32 = arith.constant 0 : i32
    %c0_i32_0 = arith.constant 0 : i32
    %c0_i32_1 = arith.constant 0 : i32
    return %arg0, %arg1, %c0_i32, %c0_i32_0 : i32, i32, i32, i32
  }
  func.func @transform_1(%arg0: i32, %arg1: i32) -> (i32, i32, i32) {
    %c0_i32 = arith.constant 0 : i32
    %c0_i32_0 = arith.constant 0 : i32
    %c0_i32_1 = arith.constant 0 : i32
    %c0_i32_2 = arith.constant 0 : i32
    return %c0_i32, %c0_i32_0, %c0_i32_1 : i32, i32, i32
  }
  func.func @transform_2(%arg0: i32, %arg1: i32) -> (i32, i32) {
    %c0_i32 = arith.constant 0 : i32
    %c0_i32_0 = arith.constant 0 : i32
    %c0_i32_1 = arith.constant 0 : i32
    return %c0_i32, %c0_i32_0 : i32, i32
  }
  func.func @transform_3(%arg0: i32, %arg1: i32) -> (i32, i32, i32) {
    %c0_i32 = arith.constant 0 : i32
    %c0_i32_0 = arith.constant 0 : i32
    return %arg0, %arg1, %c0_i32 : i32, i32, i32
  }
}

</mosaic_0001>

<llo_original>
// kernel: tile.8
$region0: #{tile.8}
  #allocation0 [shape = 's32[1]{0}', space=sflag, size = 0x4, scoped, tag = 'scoped memory for tile.8']
  %s0 = inlined_call_operand.vmem [shape: f32[8], index: 0, kind: input, shape index: {}]
  %s1 = inlined_call_operand.vmem [shape: f32[16,8], index: 1, kind: output, shape index: {}]
  // Predicated region
  $region2: #{tile.8} parent=0 // pred_check
    _
  $region3: #{tile.8} parent=0 // pred_check_branch
    %3 = sbr.rel (0) target = $region5
  $region4: #{tile.8} parent=0 // pred_region
    _
  $region5: #{tile.8} parent=0 // pred_fallthru
    _
  %v4 = vld [vmem:[%s0] ss:$0 sm:$0xff]
  %5 = vst [vmem:[%s1] sm:$0xff] %v4
  %s6 = scalar_lea.vmem %s1, 8
  %7 = vst [vmem:[%s6] sm:$0xff] %v4

// kernel: tile.9
$region0: #{tile.9}
  %s0 = inlined_call_operand.vmem [shape: f32[16,8], index: 0, kind: input, shape index: {}]
  %s1 = inlined_call_operand.vmem [shape: f32[1,128], index: 1, kind: output, shape index: {}]
  $region1: #{tile.9} parent=0
    #allocation0 [shape = 'u8[4096]{0}', space=vmem, size = 0x1000, scoped, tag = 'scoped mem for output reshape']
    %v2 = vld [vmem:[%s0] sm:$0x1]
    %vm3 = vcmask 64512
    %4 = vst.msk [vmem:[#allocation0] sm:$0x1] %vm3, %v2
    %s5 = scalar_lea.vmem %s0, 15
    %v6 = vld [vmem:[%s5] sm:$0x1]
    %7 = vrot.lane.b32.xlu0 %v6, 120
    %v8 = vpop.permute.xlu0 %7
    %vm9 = vcmask 1048512
    %10 = vst.msk [vmem:[#allocation0] sm:$0x1] %vm9, %v8
    %s11 = scalar_lea.vmem %s0, 14
    %v12 = vld [vmem:[%s11] sm:$0x1]
    %13 = vrot.lane.b32.xlu0 %v12, 112
    %v14 = vpop.permute.xlu0 %13
    %vm15 = vcmask 982912
    %16 = vst.msk [vmem:[#allocation0] sm:$0x1] %vm15, %v14
    %s17 = scalar_lea.vmem %s0, 13
    %v18 = vld [vmem:[%s17] sm:$0x1]
    %19 = vrot.lane.b32.xlu0 %v18, 104
    %v20 = vpop.permute.xlu0 %19
    %vm21 = vcmask 917312
    %22 = vst.msk [vmem:[#allocation0] sm:$0x1] %vm21, %v20
    %s23 = scalar_lea.vmem %s0, 12
    %v24 = vld [vmem:[%s23] sm:$0x1]
    %25 = vrot.lane.b32.xlu0 %v24, 96
    %v26 = vpop.permute.xlu0 %25
    %vm27 = vcmask 851712
    %28 = vst.msk [vmem:[#allocation0] sm:$0x1] %vm27, %v26
    %s29 = scalar_lea.vmem %s0, 11
    %v30 = vld [vmem:[%s29] sm:$0x1]
    %31 = vrot.lane.b32.xlu0 %v30, 88
    %v32 = vpop.permute.xlu0 %31
    %vm33 = vcmask 786112
    %34 = vst.msk [vmem:[#allocation0] sm:$0x1] %vm33, %v32
    %s35 = scalar_lea.vmem %s0, 10
    %v36 = vld [vmem:[%s35] sm:$0x1]
    %37 = vrot.lane.b32.xlu0 %v36, 80
    %v38 = vpop.permute.xlu0 %37
    %vm39 = vcmask 720512
    %40 = vst.msk [vmem:[#allocation0] sm:$0x1] %vm39, %v38
    %s41 = scalar_lea.vmem %s0, 9
    %v42 = vld [vmem:[%s41] sm:$0x1]
    %43 = vrot.lane.b32.xlu0 %v42, 72
    %v44 = vpop.permute.xlu0 %43
    %vm45 = vcmask 654912
    %46 = vst.msk [vmem:[#allocation0] sm:$0x1] %vm45, %v44
    %s47 = scalar_lea.vmem %s0, 8
    %v48 = vld [vmem:[%s47] sm:$0x1]
    %49 = vrot.lane.b32.xlu0 %v48, 64
    %v50 = vpop.permute.xlu0 %49
    %vm51 = vcmask 589312
    %52 = vst.msk [vmem:[#allocation0] sm:$0x1] %vm51, %v50
    %s53 = scalar_lea.vmem %s0, 7
    %v54 = vld [vmem:[%s53] sm:$0x1]
    %55 = vrot.lane.b32.xlu0 %v54, 56
    %v56 = vpop.permute.xlu0 %55
    %vm57 = vcmask 523712
    %58 = vst.msk [vmem:[#allocation0] sm:$0x1] %vm57, %v56
    %s59 = scalar_lea.vmem %s0, 6
    %v60 = vld [vmem:[%s59] sm:$0x1]
    %61 = vrot.lane.b32.xlu0 %v60, 48
    %v62 = vpop.permute.xlu0 %61
    %vm63 = vcmask 458112
    %64 = vst.msk [vmem:[#allocation0] sm:$0x1] %vm63, %v62
    %s65 = scalar_lea.vmem %s0, 5
    %v66 = vld [vmem:[%s65] sm:$0x1]
    %67 = vrot.lane.b32.xlu0 %v66, 40
    %v68 = vpop.permute.xlu0 %67
    %vm69 = vcmask 392512
    %70 = vst.msk [vmem:[#allocation0] sm:$0x1] %vm69, %v68
    %s71 = scalar_lea.vmem %s0, 4
    %v72 = vld [vmem:[%s71] sm:$0x1]
    %73 = vrot.lane.b32.xlu0 %v72, 32
    %v74 = vpop.permute.xlu0 %73
    %vm75 = vcmask 326912
    %76 = vst.msk [vmem:[#allocation0] sm:$0x1] %vm75, %v74
    %s77 = scalar_lea.vmem %s0, 3
    %v78 = vld [vmem:[%s77] sm:$0x1]
    %79 = vrot.lane.b32.xlu0 %v78, 24
    %v80 = vpop.permute.xlu0 %79
    %vm81 = vcmask 261312
    %82 = vst.msk [vmem:[#allocation0] sm:$0x1] %vm81, %v80
    %s83 = scalar_lea.vmem %s0, 2
    %v84 = vld [vmem:[%s83] sm:$0x1]
    %85 = vrot.lane.b32.xlu0 %v84, 16
    %v86 = vpop.permute.xlu0 %85
    %vm87 = vcmask 195712
    %88 = vst.msk [vmem:[#allocation0] sm:$0x1] %vm87, %v86
    %s89 = scalar_lea.vmem %s0, 1
    %v90 = vld [vmem:[%s89] sm:$0x1]
    %91 = vrot.lane.b32.xlu0 %v90, 8
    %v92 = vpop.permute.xlu0 %91
    %vm93 = vcmask 130112
    %94 = vst.msk [vmem:[#allocation0] sm:$0x1] %vm93, %v92
    %s96 = sshllo.u32 0, 1
    %v98 = vld [vmem:[#allocation0] sm:%s96]
    %s99 = sshllo.u32 0, 1
    %100 = vst [vmem:[%s1] sm:%s99] %v98

// kernel: basic_conv.1
$region0: #{basic_conv.1}
  #allocation0 [shape = 'u32[]', space=smem, size = 0x4, offset = 0x4, fixed_abs, tag = 'smem constant byte address 0x4 - core index']
  #allocation1 [shape = 'u32[144,128]{1,0:T(1,128)}', space=vmem, size = 0x12000, scoped, tag = 'internal scratch']
  %s0 = inlined_call_operand.vmem [shape: bf16[2,2,10,72], index: 0, kind: input, shape index: {}]
  %s1 = inlined_call_operand.vmem [shape: bf16[3,72,128], index: 1, kind: input, shape index: {}]
  %s2 = inlined_call_operand.vmem [shape: f32[1,128], index: 2, kind: input, shape index: {}]
  %s3 = inlined_call_operand.vmem [shape: bf16[2,16,128], index: 3, kind: output, shape index: {}]
  %s4 = sld [smem:[#allocation0]]
  $region45: #{basic_conv.1} parent=0
    _
  %s6 = ssub.s32 1, %s4
  %s7 = scalar_select 0, %s6, %s4
  loop: start=0, step=1, limit=6
  $region2: #{basic_conv.1} parent=0 // loop_pre_header
    _
  $region3: #{basic_conv.1} parent=0 // loop_header
    %s9 = sphi 0, %s13
    %p10 = scmp.ge.s32.totalorder %s9, 6
    %s16 = sphi 0, %s28
    %s17 = sphi 0, %s24
    %s18 = sphi 0, %s16
    %s19 = sphi 0, %s17
    %s20 = sphi 0, %s18
    %s21 = sphi 0, %s19
    %s33 = sphi 0, %s35
    %s36 = sphi 0, %s33
    %s37 = sphi 0, %s36
    %s53 = sphi 0, %s37
    %s57 = sphi 0, %s57
    %s59 = sphi 0, %s57
    %s60 = sphi 0, %s59
    %s74 = sphi 0, %s60
    %s78 = sphi 0, %s78
    %s80 = sphi 0, %s78
    %s81 = sphi 0, %s80
    %s95 = sphi 0, %s81
    %s103 = sphi 0, %s105
    %s106 = sphi 0, %s103
    %s107 = sphi 0, %s106
    %s123 = sphi 0, %s107
  $region4: #{basic_conv.1} parent=0 // loop_header_branch
    %12 = sbr.rel (%p10) target = $region8
  $region5: #{basic_conv.1} parent=0 // loop_body
    %s14 = ssub.s32 %s9, 1
    %s15 = ssub.s32 %s9, 2
    %s22 = sadd.s32 1, %s17
    %p23 = scmp.ge.s32.totalorder %s22, 2
    %s24 = scalar_select %p23, 0, %s22
    %s25 = sadd.s32 1, %s16
    %s26 = scalar_select %p23, %s25, %s16
    %p27 = scmp.ge.s32.totalorder %s26, 2
    %s28 = scalar_select %p27, 0, %s26
    %s29 = ssub.s32 %s16, %s28
    %s30 = ssub.s32 %s17, %s24
    %s31 = sor.u32 %s29, %s30
    %p32 = scmp.eq.s32.totalorder %s31, 0
    %s34 = sadd.s32 %s33, 1
    %s35 = scalar_select %p32, %s33, %s34
    %p38 = pneg %p32
    %p39 = scmp.eq.s32.totalorder %s9, 3
    %p40 = por %p38, %p39
    %p41 = scmp.ne.s32.totalorder %s33, %s36
    %p42 = scmp.eq.s32.totalorder %s9, 0
    %p43 = por %p41, %p42
    %p44 = scmp.ne.s32.totalorder %s33, %s36
    %p45 = scmp.eq.s32.totalorder %s14, 3
    %p46 = por %p44, %p45
    %p47 = scmp.ne.s32.totalorder %s36, %s37
    %p48 = scmp.eq.s32.totalorder %s14, 0
    %p49 = por %p47, %p48
    %p50 = scmp.ne.s32.totalorder %s36, %s37
    %p51 = scmp.eq.s32.totalorder %s15, 3
    %p52 = por %p50, %p51
    %p54 = scmp.ne.s32.totalorder %s37, %s53
    %p55 = scmp.eq.s32.totalorder %s15, 0
    %p56 = por %p54, %p55
    %s58 = sadd.s32 %s57, 1
    %p61 = scmp.eq.s32.totalorder %s9, 3
    %p62 = scmp.ne.s32.totalorder %s57, %s59
    %p63 = scmp.eq.s32.totalorder %s9, 0
    %p64 = por %p62, %p63
    %p65 = scmp.ne.s32.totalorder %s57, %s59
    %p66 = scmp.eq.s32.totalorder %s14, 3
    %p67 = por %p65, %p66
    %p68 = scmp.ne.s32.totalorder %s59, %s60
    %p69 = scmp.eq.s32.totalorder %s14, 0
    %p70 = por %p68, %p69
    %p71 = scmp.ne.s32.totalorder %s59, %s60
    %p72 = scmp.eq.s32.totalorder %s15, 3
    %p73 = por %p71, %p72
    %p75 = scmp.ne.s32.totalorder %s60, %s74
    %p76 = scmp.eq.s32.totalorder %s15, 0
    %p77 = por %p75, %p76
    %s79 = sadd.s32 %s78, 1
    %p82 = scmp.eq.s32.totalorder %s9, 3
    %p83 = scmp.ne.s32.totalorder %s78, %s80
    %p84 = scmp.eq.s32.totalorder %s9, 0
    %p85 = por %p83, %p84
    %p86 = scmp.ne.s32.totalorder %s78, %s80
    %p87 = scmp.eq.s32.totalorder %s14, 3
    %p88 = por %p86, %p87
    %p89 = scmp.ne.s32.totalorder %s80, %s81
    %p90 = scmp.eq.s32.totalorder %s14, 0
    %p91 = por %p89, %p90
    %p92 = scmp.ne.s32.totalorder %s80, %s81
    %p93 = scmp.eq.s32.totalorder %s15, 3
    %p94 = por %p92, %p93
    %p96 = scmp.ne.s32.totalorder %s81, %s95
    %p97 = scmp.eq.s32.totalorder %s15, 0
    %p98 = por %p96, %p97
    %s99 = ssub.s32 %s16, %s28
    %s100 = ssub.s32 %s17, %s24
    %s101 = sor.u32 %s99, %s100
    %p102 = scmp.eq.s32.totalorder %s101, 0
    %s104 = sadd.s32 %s103, 1
    %s105 = scalar_select %p102, %s103, %s104
    %p108 = pneg %p102
    %p109 = scmp.eq.s32.totalorder %s9, 3
    %p110 = por %p108, %p109
    %p111 = scmp.ne.s32.totalorder %s103, %s106
    %p112 = scmp.eq.s32.totalorder %s9, 0
    %p113 = por %p111, %p112
    %p114 = scmp.ne.s32.totalorder %s103, %s106
    %p115 = scmp.eq.s32.totalorder %s14, 3
    %p116 = por %p114, %p115
    %p117 = scmp.ne.s32.totalorder %s106, %s107
    %p118 = scmp.eq.s32.totalorder %s14, 0
    %p119 = por %p117, %p118
    %p120 = scmp.ne.s32.totalorder %s106, %s107
    %p121 = scmp.eq.s32.totalorder %s15, 3
    %p122 = por %p120, %p121
    %p124 = scmp.ne.s32.totalorder %s107, %s123
    %p125 = scmp.eq.s32.totalorder %s15, 0
    %p126 = por %p124, %p125
    %p127 = scmp.le.s32.totalorder 1, %s9
    %p128 = scmp.lt.s32.totalorder %s9, 5
    %p129 = pnand %p127, %p128
    %p130 = pneg %p129
    // Predicated region
    $region9: #{basic_conv.1} parent=5 // pred_check
      _
    $region10: #{basic_conv.1} parent=5 // pred_check_branch
      %132 = sbr.rel (%p129) target = $region12
    $region11: #{basic_conv.1} parent=5 // pred_region
      %s133 = ssub.s32 %s9, 1
      // Predicated region
      $region13: #{basic_conv.1} parent=11 // pred_check
        %p134 = pneg %p70
      $region14: #{basic_conv.1} parent=11 // pred_check_branch
        %136 = sbr.rel (%p134) target = $region16
      $region15: #{basic_conv.1} parent=11 // pred_region
        _
      $region16: #{basic_conv.1} parent=11 // pred_fallthru
        _
      // Predicated region
      $region17: #{basic_conv.1} parent=11 // pred_check
        %p137 = pneg %p91
      $region18: #{basic_conv.1} parent=11 // pred_check_branch
        %139 = sbr.rel (%p137) target = $region20
      $region19: #{basic_conv.1} parent=11 // pred_region
        _
      $region20: #{basic_conv.1} parent=11 // pred_fallthru
        _
    $region12: #{basic_conv.1} parent=5 // pred_fallthru
      _
    %p140 = scmp.lt.s32.totalorder %s9, 4
    // Predicated region
    $region21: #{basic_conv.1} parent=5 // pred_check
      %p141 = pneg %p140
    $region22: #{basic_conv.1} parent=5 // pred_check_branch
      %143 = sbr.rel (%p141) target = $region24
    $region23: #{basic_conv.1} parent=5 // pred_region
      // Predicated region
      $region25: #{basic_conv.1} parent=23 // pred_check
        %p144 = pneg %p43
      $region26: #{basic_conv.1} parent=23 // pred_check_branch
        %146 = sbr.rel (%p144) target = $region28
      $region27: #{basic_conv.1} parent=23 // pred_region
        %p147 = scmp.lt.s32.totalorder %s16, 1
        %s148 = scalar_select %p147, %s16, 1
        %p149 = scmp.lt.s32.totalorder %s17, 1
        %s150 = scalar_select %p149, %s17, 1
        %s151 = smul.addr %s150, 2
        %s152 = smul.addr %s148, 4
        %s153 = sadd.s32 %s151, %s152
        %s154 = smul.addr %s153, 4
        %s155 = scalar_lea.vmem %s0, %s154
      $region28: #{basic_conv.1} parent=23 // pred_fallthru
        _
    $region24: #{basic_conv.1} parent=5 // pred_fallthru
      _
    %p156 = scmp.le.s32.totalorder 1, %s9
    %p157 = scmp.lt.s32.totalorder %s9, 5
    %p158 = pnand %p156, %p157
    %p159 = pneg %p158
    // Predicated region
    $region29: #{basic_conv.1} parent=5 // pred_check
      _
    $region30: #{basic_conv.1} parent=5 // pred_check_branch
      %161 = sbr.rel (%p158) target = $region32
    $region31: #{basic_conv.1} parent=5 // pred_region
      %s162 = ssub.s32 %s9, 1
      %p163 = scmp.lt.s32.totalorder %s18, 1
      %s164 = scalar_select %p163, %s18, 1
      %p165 = scmp.lt.s32.totalorder %s19, 1
      %s166 = scalar_select %p165, %s19, 1
      %s167 = smul.addr %s166, 2
      %s168 = smul.addr %s164, 4
      %s169 = sadd.s32 %s167, %s168
      %s170 = smul.addr %s169, 4
      %s171 = scalar_lea.vmem %s0, %s170
      %p172 = pneg %p49
      %p173 = pneg %p46
      %p174 = pneg %p70
      %p175 = pneg %p67
      %p176 = pneg %p91
      %p177 = pneg %p88
      %p178 = pneg %p119
      %p179 = pneg %p116
      %p180 = scmp.lt.s32.totalorder %s18, 1
      %s181 = scalar_select %p180, %s18, 1
      %p182 = scmp.lt.s32.totalorder %s19, 1
      %s183 = scalar_select %p182, %s19, 1
      %s184 = smul.addr %s181, 2
      %s185 = sadd.s32 %s183, %s184
      %s186 = smul.addr %s185, 4
      %s187 = scalar_lea.vmem %s3, %s186
      %p188 = scmp.lt.s32.totalorder %s18, 1
      %s189 = scalar_select %p188, %s18, 1
      %p190 = scmp.lt.s32.totalorder %s19, 1
      %s191 = scalar_select %p190, %s19, 1
      %s192 = smul.addr %s191, 2
      %s193 = smul.addr %s189, 4
      %s194 = sadd.s32 %s192, %s193
      %s195 = smul.addr %s194, 4
      %s196 = scalar_lea.vmem %s0, %s195
      %p197 = scmp.lt.s32.totalorder %s18, 1
      %s198 = scalar_select %p197, %s18, 1
      %p199 = scmp.lt.s32.totalorder %s19, 1
      %s200 = scalar_select %p199, %s19, 1
      %s201 = smul.addr %s198, 2
      %s202 = sadd.s32 %s200, %s201
      %s203 = smul.addr %s202, 4
      %s204 = scalar_lea.vmem %s3, %s203
      %v206 = vld [vmem:[%s196] sm:$0xf]
      %v207 = vld [vmem:[%s1] sm:$0xf]
      %v208 = vld [vmem:[%s1 + $0x4] sm:$0xf]
      %v209 = vld [vmem:[%s1 + $0x8] sm:$0xf]
      %v210 = vld [vmem:[%s1 + $0xc] sm:$0xf]
      %v211 = vld [vmem:[%s1 + $0x10] sm:$0xf]
      %v212 = vld [vmem:[%s1 + $0x14] sm:$0xf]
      %v213 = vld [vmem:[%s1 + $0x18] sm:$0xf]
      %v214 = vld [vmem:[%s1 + $0x1c] sm:$0xf]
      %v215 = vld [vmem:[%s1 + $0x20] sm:$0xf]
      %v216 = vld [vmem:[%s196 + $0x4] sm:$0x1]
      %s217 = scalar_lea.vmem %s1, 36
      %v218 = vld [vmem:[%s217] sm:$0xf]
      %v219 = vld [vmem:[%s217 + $0x4] sm:$0xf]
      %v220 = vld [vmem:[%s217 + $0x8] sm:$0xf]
      %v221 = vld [vmem:[%s217 + $0xc] sm:$0xf]
      %v222 = vld [vmem:[%s217 + $0x10] sm:$0xf]
      %v223 = vld [vmem:[%s217 + $0x14] sm:$0xf]
      %v224 = vld [vmem:[%s217 + $0x18] sm:$0xf]
      %v225 = vld [vmem:[%s217 + $0x1c] sm:$0xf]
      %v226 = vld [vmem:[%s217 + $0x20] sm:$0xf]
      %v229 = vunpack.c.l.b16 %v206
      %v230 = vunpack.c.l.b16 %v216
      %v231 = vpack.c.b16 %v230, %v229
      %v233 = vshrl.u32 %v231, 16
      %v235 = vshll.u32 %v231, 16
      %v237 = vrot.slane %v235, 1
      %v238 = vor.u32 %v233, %v237
      %v248 = vunpack.c.l.b16 %v218
      %v249 = vunpack.c.l.b16 %v219
      %v250 = vunpack.c.l.b16 %v220
      %v251 = vunpack.c.l.b16 %v221
      %v252 = vunpack.c.l.b16 %v222
      %v253 = vunpack.c.l.b16 %v223
      %v254 = vunpack.c.l.b16 %v224
      %v255 = vunpack.c.l.b16 %v225
      %v256 = vunpack.c.l.b16 %v226
      %v257 = vpack.c.b16 %v249, %v248
      %v258 = vpack.c.b16 %v251, %v250
      %v259 = vpack.c.b16 %v253, %v252
      %v260 = vpack.c.b16 %v255, %v254
      %v261 = vpack.c.b16 %v256, %v256
      %vm266 = vcmask 588800
      %v268 = vsel %vm266, %v238, 0
      %vm270 = vcmask 1043456
      %v272 = vsel %vm270, %v261, 0
      %274 = vmatprep.subr.bf16.mxu0 0
      %275 = vmatpush1.bf16.msra.mxu0 %v257
      %276 = vmatprep.subr.bf16.mxu0 0
      %277 = vmatpush1.bf16.msra.mxu0 %v258
      %278 = vmatprep.subr.bf16.mxu0 0
      %279 = vmatpush1.bf16.msra.mxu0 %v259
      %280 = vmatprep.subr.bf16.mxu0 0
      %281 = vmatpush1.bf16.msra.mxu0 %v260
      %282 = vmatprep.subr.bf16.mxu0 0
      %283 = vmatpush1.bf16.msra.mxu0 %v272
      %284 = vmatprep.subr.bf16.mxu0 0
      %285 = vmatpush1.bf16.msra.mxu0 0
      %286 = vmatprep.subr.bf16.mxu0 0
      %287 = vmatpush1.bf16.msra.mxu0 0
      %288 = vmatprep.subr.bf16.mxu0 0
      %289 = vmatpush1.bf16.msra.mxu0 0
      %290 = vmatprep.subr.bf16.mxu0 0
      %291 = vmatpush1.bf16.msra.mxu0 0
      %292 = vmatprep.subr.bf16.mxu0 0
      %293 = vmatpush1.bf16.msra.mxu0 0
      %294 = vmatprep.subr.bf16.mxu0 0
      %295 = vmatpush1.bf16.msra.mxu0 0
      %296 = vmatprep.subr.bf16.mxu0 0
      %297 = vmatpush1.bf16.msra.mxu0 0
      %298 = vmatprep.subr.bf16.mxu0 0
      %299 = vmatpush1.bf16.msra.mxu0 0
      %300 = vmatprep.subr.bf16.mxu0 0
      %301 = vmatpush1.bf16.msra.mxu0 0
      %302 = vmatprep.subr.bf16.mxu0 0
      %303 = vmatpush1.bf16.msra.mxu0 0
      %304 = vmatprep.subr.bf16.mxu0 0
      %305 = vmatpush1.bf16.msra.mxu0 0
      %306 = vmatprep.mubr.bf16.mxu0 0
      %307 = vmatmul.mubr.bf16.gmra.mrb[0].mxu0 %v268
      %v308 = vpop.f32.mrb[0].mxu0
      %v309 = vadd.f32 0.0, %v308
      %v310 = vpop.f32.mrb[0].mxu0
      %v311 = vpop.f32.mrb[0].mxu0
      %v312 = vpop.f32.mrb[0].mxu0
      %313 = vdwg.mxu0
      %v323 = vunpack.c.l.b16 %v207
      %v324 = vunpack.c.l.b16 %v208
      %v325 = vunpack.c.l.b16 %v209
      %v326 = vunpack.c.l.b16 %v210
      %v327 = vunpack.c.l.b16 %v211
      %v328 = vunpack.c.l.b16 %v212
      %v329 = vunpack.c.l.b16 %v213
      %v330 = vunpack.c.l.b16 %v214
      %v331 = vunpack.c.l.b16 %v215
      %v332 = vpack.c.b16 %v324, %v323
      %v333 = vpack.c.b16 %v326, %v325
      %v334 = vpack.c.b16 %v328, %v327
      %v335 = vpack.c.b16 %v330, %v329
      %v336 = vpack.c.b16 %v331, %v331
      %v342 = vsel %vm266, %v206, 0
      %v345 = vsel %vm270, %v336, 0
      %347 = vmatprep.subr.bf16.mxu0 0
      %348 = vmatpush1.bf16.msra.mxu0 %v332
      %349 = vmatprep.subr.bf16.mxu0 0
      %350 = vmatpush1.bf16.msra.mxu0 %v333
      %351 = vmatprep.subr.bf16.mxu0 0
      %352 = vmatpush1.bf16.msra.mxu0 %v334
      %353 = vmatprep.subr.bf16.mxu0 0
      %354 = vmatpush1.bf16.msra.mxu0 %v335
      %355 = vmatprep.subr.bf16.mxu0 0
      %356 = vmatpush1.bf16.msra.mxu0 %v345
      %357 = vmatprep.subr.bf16.mxu0 0
      %358 = vmatpush1.bf16.msra.mxu0 0
      %359 = vmatprep.subr.bf16.mxu0 0
      %360 = vmatpush1.bf16.msra.mxu0 0
      %361 = vmatprep.subr.bf16.mxu0 0
      %362 = vmatpush1.bf16.msra.mxu0 0
      %363 = vmatprep.subr.bf16.mxu0 0
      %364 = vmatpush1.bf16.msra.mxu0 0
      %365 = vmatprep.subr.bf16.mxu0 0
      %366 = vmatpush1.bf16.msra.mxu0 0
      %367 = vmatprep.subr.bf16.mxu0 0
      %368 = vmatpush1.bf16.msra.mxu0 0
      %369 = vmatprep.subr.bf16.mxu0 0
      %370 = vmatpush1.bf16.msra.mxu0 0
      %371 = vmatprep.subr.bf16.mxu0 0
      %372 = vmatpush1.bf16.msra.mxu0 0
      %373 = vmatprep.subr.bf16.mxu0 0
      %374 = vmatpush1.bf16.msra.mxu0 0
      %375 = vmatprep.subr.bf16.mxu0 0
      %376 = vmatpush1.bf16.msra.mxu0 0
      %377 = vmatprep.subr.bf16.mxu0 0
      %378 = vmatpush1.bf16.msra.mxu0 0
      %379 = vmatprep.mubr.bf16.mxu0 0
      %380 = vmatmul.mubr.bf16.gmra.mrb[0].mxu0 %v342
      %v381 = vpop.f32.mrb[0].mxu0
      %v382 = vadd.f32 %v309, %v381
      %v383 = vpop.f32.mrb[0].mxu0
      %v384 = vpop.f32.mrb[0].mxu0
      %v385 = vpop.f32.mrb[0].mxu0
      %386 = vdwg.mxu0
      %v387 = vld [vmem:[%s196] sm:$0xe]
      %s388 = scalar_lea.vmem %s1, 72
      %v389 = vld [vmem:[%s388] sm:$0xf]
      %v390 = vld [vmem:[%s388 + $0x4] sm:$0xf]
      %v391 = vld [vmem:[%s388 + $0x8] sm:$0xf]
      %v392 = vld [vmem:[%s388 + $0xc] sm:$0xf]
      %v393 = vld [vmem:[%s388 + $0x10] sm:$0xf]
      %v394 = vld [vmem:[%s388 + $0x14] sm:$0xf]
      %v395 = vld [vmem:[%s388 + $0x18] sm:$0xf]
      %v396 = vld [vmem:[%s388 + $0x1c] sm:$0xf]
      %v397 = vld [vmem:[%s388 + $0x20] sm:$0xf]
      %v399 = vunpack.c.l.b16 %v387
      %v400 = vpack.c.b16 %v230, %v399
      %v401 = vrot.slane %v400, 1
      %v411 = vunpack.c.l.b16 %v389
      %v412 = vunpack.c.l.b16 %v390
      %v413 = vunpack.c.l.b16 %v391
      %v414 = vunpack.c.l.b16 %v392
      %v415 = vunpack.c.l.b16 %v393
      %v416 = vunpack.c.l.b16 %v394
      %v417 = vunpack.c.l.b16 %v395
      %v418 = vunpack.c.l.b16 %v396
      %v419 = vunpack.c.l.b16 %v397
      %v420 = vpack.c.b16 %v412, %v411
      %v421 = vpack.c.b16 %v414, %v413
      %v422 = vpack.c.b16 %v416, %v415
      %v423 = vpack.c.b16 %v418, %v417
      %v424 = vpack.c.b16 %v419, %v419
      %v430 = vsel %vm266, %v401, 0
      %v433 = vsel %vm270, %v424, 0
      %435 = vmatprep.subr.bf16.mxu0 0
      %436 = vmatpush1.bf16.msra.mxu0 %v420
      %437 = vmatprep.subr.bf16.mxu0 0
      %438 = vmatpush1.bf16.msra.mxu0 %v421
      %439 = vmatprep.subr.bf16.mxu0 0
      %440 = vmatpush1.bf16.msra.mxu0 %v422
      %441 = vmatprep.subr.bf16.mxu0 0
      %442 = vmatpush1.bf16.msra.mxu0 %v423
      %443 = vmatprep.subr.bf16.mxu0 0
      %444 = vmatpush1.bf16.msra.mxu0 %v433
      %445 = vmatprep.subr.bf16.mxu0 0
      %446 = vmatpush1.bf16.msra.mxu0 0
      %447 = vmatprep.subr.bf16.mxu0 0
      %448 = vmatpush1.bf16.msra.mxu0 0
      %449 = vmatprep.subr.bf16.mxu0 0
      %450 = vmatpush1.bf16.msra.mxu0 0
      %451 = vmatprep.subr.bf16.mxu0 0
      %452 = vmatpush1.bf16.msra.mxu0 0
      %453 = vmatprep.subr.bf16.mxu0 0
      %454 = vmatpush1.bf16.msra.mxu0 0
      %455 = vmatprep.subr.bf16.mxu0 0
      %456 = vmatpush1.bf16.msra.mxu0 0
      %457 = vmatprep.subr.bf16.mxu0 0
      %458 = vmatpush1.bf16.msra.mxu0 0
      %459 = vmatprep.subr.bf16.mxu0 0
      %460 = vmatpush1.bf16.msra.mxu0 0
      %461 = vmatprep.subr.bf16.mxu0 0
      %462 = vmatpush1.bf16.msra.mxu0 0
      %463 = vmatprep.subr.bf16.mxu0 0
      %464 = vmatpush1.bf16.msra.mxu0 0
      %465 = vmatprep.subr.bf16.mxu0 0
      %466 = vmatpush1.bf16.msra.mxu0 0
      %467 = vmatprep.mubr.bf16.mxu0 0
      %468 = vmatmul.mubr.bf16.gmra.mrb[0].mxu0 %v430
      %v469 = vpop.f32.mrb[0].mxu0
      %v470 = vadd.f32 0.0, %v469
      %v471 = vpop.f32.mrb[0].mxu0
      %v472 = vpop.f32.mrb[0].mxu0
      %v473 = vpop.f32.mrb[0].mxu0
      %474 = vdwg.mxu0
      %v475 = vadd.f32 %v382, %v470
      %v476 = vld [vmem:[%s2] sm:$0x1]
      %v478 = vlaneseq
      %v479 = vshrl.u32 %v478, 7
      %v480 = vsub.s32 0, %v479
      %v481 = vrot.slane %v476, %v480
      %v483 = vadd.f32 %v475, %v481
      %vm484 = vcmp.gt.f32.partialorder %v483, 0.0
      %v485 = vmul.f32 %v483, 0.2
      %v486 = vsel %vm484, %v483, %v485
      %v487 = vpack.c.bf16 %v486, %v486
      %488 = vst [vmem:[%s204] sm:$0xf] %v487
      %p489 = scmp.lt.s32.totalorder %s18, 1
      %s490 = scalar_select %p489, %s18, 1
      %p491 = scmp.lt.s32.totalorder %s19, 1
      %s492 = scalar_select %p491, %s19, 1
      %s493 = smul.addr %s490, 2
      %s494 = sadd.s32 %s492, %s493
      %s495 = smul.addr %s494, 4
      %s496 = scalar_lea.vmem %s3, %s495
      // Predicated region
      $region33: #{basic_conv.1} parent=31 // pred_check
        %p497 = pneg %p116
      $region34: #{basic_conv.1} parent=31 // pred_check_branch
        %499 = sbr.rel (%p497) target = $region36
      $region35: #{basic_conv.1} parent=31 // pred_region
        _
      $region36: #{basic_conv.1} parent=31 // pred_fallthru
        _
    $region32: #{basic_conv.1} parent=5 // pred_fallthru
      _
    %p500 = scmp.le.s32.totalorder 2, %s9
    // Predicated region
    $region37: #{basic_conv.1} parent=5 // pred_check
      %p501 = pneg %p500
    $region38: #{basic_conv.1} parent=5 // pred_check_branch
      %503 = sbr.rel (%p501) target = $region40
    $region39: #{basic_conv.1} parent=5 // pred_region
      %s504 = ssub.s32 %s9, 2
      // Predicated region
      $region41: #{basic_conv.1} parent=39 // pred_check
        %p505 = pneg %p122
      $region42: #{basic_conv.1} parent=39 // pred_check_branch
        %507 = sbr.rel (%p505) target = $region44
      $region43: #{basic_conv.1} parent=39 // pred_region
        %p508 = scmp.lt.s32.totalorder %s20, 1
        %s509 = scalar_select %p508, %s20, 1
        %p510 = scmp.lt.s32.totalorder %s21, 1
        %s511 = scalar_select %p510, %s21, 1
        %s512 = smul.addr %s509, 2
        %s513 = sadd.s32 %s511, %s512
        %s514 = smul.addr %s513, 4
        %s515 = scalar_lea.vmem %s3, %s514
      $region44: #{basic_conv.1} parent=39 // pred_fallthru
        _
    $region40: #{basic_conv.1} parent=5 // pred_fallthru
      _
  $region6: #{basic_conv.1} parent=0 // loop_footer
    %s13 = sadd.s32 1, %s9
  $region7: #{basic_conv.1} parent=0 // loop_footer_branch
    %8 = sbr.rel target = $region3
  $region8: #{basic_conv.1} parent=0 // loop_exit
    _

</llo_original>
